<compile_context>
chip_gen: v7x
topology: tpu7x:2x2x1
jax: 0.10.0
libtpu: 0.0.40
codegen_flags: <defaults>
</compile_context>

<pallas_src>
import functools

import jax
import jax.numpy as jnp
from jax.experimental import pallas as pl
from jax.experimental.pallas import tpu as pltpu


LANE = 128     # TPU lane width (last dim)
SUBLANE = 8    # TPU sublane width (second-to-last dim, f32)


def _round_up(n: int, m: int) -> int:
    return ((n + m - 1) // m) * m


def _fused_mlp_kernel(*refs, num_layers: int):
    """Fused MLP over one batch tile.

    refs = (x, w0, b0, w1, b1, ..., w_last, b_last, out).
    Weights are bf16 (MXU-native), biases f32. Hidden layers get ReLU; the
    final layer does not. Intermediates never leave vregs/VMEM; only the
    final (lane-padded) activation tile is stored.
    """
    x_ref = refs[0]
    o_ref = refs[-1]
    wb_refs = refs[1:-1]

    h = x_ref[...].astype(jnp.float32)
    for li in range(num_layers):
        w = wb_refs[2 * li][...]                    # bf16 [Din, Dout]
        b = wb_refs[2 * li + 1][...]                # f32  [1, Dout], broadcasts
        h = jnp.dot(h.astype(jnp.bfloat16), w,
                    preferred_element_type=jnp.float32) + b
        if li < num_layers - 1:
            h = jnp.maximum(h, 0.0)                 # ReLU on hidden layers only
    o_ref[...] = h.astype(o_ref.dtype)


def init_encoder_params(key, input_dim, layer_number, output_dim,
                        dtype=jnp.float32):
    """Deterministic init mimicking nn.Linear's U(-1/sqrt(fan_in), 1/sqrt(fan_in)).

    Weights are stored as [in_features, out_features] (transposed vs PyTorch)
    so the kernel computes x @ W + b directly.
    """
    dims = []
    current_dim = input_dim
    for _ in range(layer_number):
        next_dim = int(current_dim / 2)
        dims.append((current_dim, next_dim))
        current_dim = next_dim
    dims.append((current_dim, output_dim))          # output layer

    params = []
    for (din, dout) in dims:
        key, kw, kb = jax.random.split(key, 3)
        bound = 1.0 / (din ** 0.5)
        w = jax.random.uniform(kw, (din, dout), dtype, -bound, bound)
        b = jax.random.uniform(kb, (dout,), dtype, -bound, bound)
        params.append((w, b))
    return params


def prepare_kernel_params(params, weight_dtype=jnp.bfloat16):
    """Cast weights to bf16; keep biases f32 as [1, Dout].

    Only the final layer's output dim is zero-padded to 128 lanes (unmasked
    lane-dense final store); interior weights keep their natural shapes
    (whole-array blocks satisfy the tiling rule and avoid 16-64x pad bloat).
    """
    prepared = []
    n = len(params)
    for li, (w, b) in enumerate(params):
        din, dout = w.shape
        if li == n - 1:
            doutp = _round_up(dout, LANE)
            wp = jnp.zeros((din, doutp), w.dtype).at[:, :dout].set(w)
            bp = jnp.zeros((1, doutp), b.dtype).at[0, :dout].set(b)
        else:
            wp = w
            bp = b.reshape(1, dout)
        prepared.append((wp.astype(weight_dtype), bp.astype(jnp.float32)))
    return prepared


def encoder_forward(kernel_params, x, output_dim, *, tm=256):
    """Forward pass of the whole encoder in ONE fused, batch-tiled Pallas call."""
    B, din = x.shape
    tm = min(tm, _round_up(B, SUBLANE))             # batch-tile rows (sublane-aligned)
    bp = _round_up(B, tm)
    xp = x if bp == B else jnp.zeros((bp, din), x.dtype).at[:B].set(x)

    flat = []
    in_specs = [pl.BlockSpec((tm, din), lambda i: (i, 0))]   # x: tiled over batch
    for (w, b) in kernel_params:
        flat.extend((w, b))
        # Weights/biases: whole-array blocks, same block index every grid step
        # -> DMA'd once, resident in VMEM across all batch tiles.
        in_specs.append(pl.BlockSpec(w.shape, lambda i: (0, 0)))
        in_specs.append(pl.BlockSpec(b.shape, lambda i: (0, 0)))

    num_layers = len(kernel_params)
    doutp = kernel_params[-1][0].shape[1]           # final dim, lane-padded to 128

    flops = 2 * bp * sum(w.shape[0] * w.shape[1] for w, _ in kernel_params)
    bytes_accessed = (
        xp.size * xp.dtype.itemsize
        + sum(w.size * w.dtype.itemsize + b.size * b.dtype.itemsize
              for w, b in kernel_params)
        + bp * doutp * x.dtype.itemsize)

    out_padded = pl.pallas_call(
        functools.partial(_fused_mlp_kernel, num_layers=num_layers),
        grid=(bp // tm,),
        in_specs=in_specs,
        out_specs=pl.BlockSpec((tm, doutp), lambda i: (i, 0)),
        out_shape=jax.ShapeDtypeStruct((bp, doutp), x.dtype),
        compiler_params=pltpu.CompilerParams(
            dimension_semantics=("parallel",)),      # batch tiles -> both v7x TCs
        cost_estimate=pl.CostEstimate(
            flops=flops, transcendentals=0, bytes_accessed=bytes_accessed),
    )(xp, *flat)

    # Slice back to the logical (unpadded) output.
    return out_padded[:B, :output_dim]


def encoder_forward_ref(kernel_params, x, output_dim):
    """Pure-JAX f32 reference (same bf16 weights, f32 math) for correctness."""
    h = x.astype(jnp.float32)
    n = len(kernel_params)
    for li, (w, b) in enumerate(kernel_params):
        h = h @ w.astype(jnp.float32) + b
        if li < n - 1:
            h = jnp.maximum(h, 0.0)
    return h[:, :output_dim]


if __name__ == "__main__":
    # Config implied by the module: input_dim, layer_number, output_dim.
    INPUT_DIM = 64
    LAYER_NUMBER = 2   # 64 -> 32 -> 16
    OUTPUT_DIM = 16
    BATCH = 512        # 2 x 256-row tiles: amortizes the launch, feeds both v7x TCs

    key = jax.random.PRNGKey(0)
    key, kx = jax.random.split(key)
    x = jax.random.normal(kx, (BATCH, INPUT_DIM), dtype=jnp.float32)

    params = init_encoder_params(key, INPUT_DIM, LAYER_NUMBER, OUTPUT_DIM)
    kernel_params = prepare_kernel_params(params)

    out = encoder_forward(kernel_params, x, OUTPUT_DIM, tm=256)
    out = jax.block_until_ready(out)

    ref = encoder_forward_ref(kernel_params, x, OUTPUT_DIM)
    assert out.shape == (BATCH, OUTPUT_DIM), out.shape
    # bf16 MXU inputs with f32 accumulation vs pure-f32 reference.
    assert jnp.allclose(out, ref, atol=2e-2, rtol=2e-2), (
        "Pallas output mismatch vs reference"
    )
    print("KERNEL_OK")
</pallas_src>

<mosaic_0001>
module attributes {stable_mosaic.version = 11 : i64} {
  func.func @_fused_mlp_kernel(%arg0: i32, %arg1: memref<256x64xf32, #tpu.memory_space<vmem>>, %arg2: memref<64x32xbf16, #tpu.memory_space<vmem>>, %arg3: memref<1x32xf32, #tpu.memory_space<vmem>>, %arg4: memref<32x16xbf16, #tpu.memory_space<vmem>>, %arg5: memref<1x16xf32, #tpu.memory_space<vmem>>, %arg6: memref<16x128xbf16, #tpu.memory_space<vmem>>, %arg7: memref<1x128xf32, #tpu.memory_space<vmem>>, %arg8: memref<256x128xf32, #tpu.memory_space<vmem>>) attributes {dimension_semantics = [#tpu.dimension_semantics<parallel>], iteration_bounds = array<i64: 2>, scalar_prefetch = 0 : i64, scratch_operands = 0 : i64, tpu.core_type = #tpu.core_type<tc>, window_params = [{transform_indices = @transform_0, window_bounds = array<i64: 256, 64>}, {pipeline_mode = #tpu.pipeline_mode<synchronous>, transform_indices = @transform_1, window_bounds = array<i64: 64, 32>}, {pipeline_mode = #tpu.pipeline_mode<synchronous>, transform_indices = @transform_2, window_bounds = array<i64: 1, 32>}, {pipeline_mode = #tpu.pipeline_mode<synchronous>, transform_indices = @transform_3, window_bounds = array<i64: 32, 16>}, {pipeline_mode = #tpu.pipeline_mode<synchronous>, transform_indices = @transform_4, window_bounds = array<i64: 1, 16>}, {pipeline_mode = #tpu.pipeline_mode<synchronous>, transform_indices = @transform_5, window_bounds = array<i64: 16, 128>}, {pipeline_mode = #tpu.pipeline_mode<synchronous>, transform_indices = @transform_6, window_bounds = array<i64: 1, 128>}, {transform_indices = @transform_7, window_bounds = array<i64: 256, 128>}]} {
    %c0 = arith.constant 0 : index
    %c0_0 = arith.constant 0 : index
    %0 = vector.load %arg1[%c0, %c0_0] : memref<256x64xf32, #tpu.memory_space<vmem>>, vector<256x64xf32>
    %c0_1 = arith.constant 0 : index
    %c0_2 = arith.constant 0 : index
    %1 = vector.load %arg2[%c0_1, %c0_2] : memref<64x32xbf16, #tpu.memory_space<vmem>>, vector<64x32xbf16>
    %c0_3 = arith.constant 0 : index
    %c0_4 = arith.constant 0 : index
    %2 = vector.load %arg3[%c0_3, %c0_4] : memref<1x32xf32, #tpu.memory_space<vmem>>, vector<1x32xf32>
    %3 = arith.truncf %0 : vector<256x64xf32> to vector<256x64xbf16>
    %cst = arith.constant dense<0.000000e+00> : vector<256x32xf32>
    %4 = tpu.matmul %3, %1, %cst {dimension_numbers = #tpu.dot_dimension_numbers<[1], [0], [0], [1], [0, 0, 1, 1], [], []>} : vector<256x64xbf16>, vector<64x32xbf16>, vector<256x32xf32> -> vector<256x32xf32>
    %5 = vector.broadcast %2 : vector<1x32xf32> to vector<256x32xf32>
    %6 = arith.addf %4, %5 : vector<256x32xf32>
    %cst_5 = arith.constant 0.000000e+00 : f32
    %7 = vector.broadcast %cst_5 : f32 to vector<256x32xf32>
    %8 = arith.maximumf %6, %7 : vector<256x32xf32>
    %c0_6 = arith.constant 0 : index
    %c0_7 = arith.constant 0 : index
    %9 = vector.load %arg4[%c0_6, %c0_7] : memref<32x16xbf16, #tpu.memory_space<vmem>>, vector<32x16xbf16>
    %c0_8 = arith.constant 0 : index
    %c0_9 = arith.constant 0 : index
    %10 = vector.load %arg5[%c0_8, %c0_9] : memref<1x16xf32, #tpu.memory_space<vmem>>, vector<1x16xf32>
    %11 = arith.truncf %8 : vector<256x32xf32> to vector<256x32xbf16>
    %cst_10 = arith.constant dense<0.000000e+00> : vector<256x16xf32>
    %12 = tpu.matmul %11, %9, %cst_10 {dimension_numbers = #tpu.dot_dimension_numbers<[1], [0], [0], [1], [0, 0, 1, 1], [], []>} : vector<256x32xbf16>, vector<32x16xbf16>, vector<256x16xf32> -> vector<256x16xf32>
    %13 = vector.broadcast %10 : vector<1x16xf32> to vector<256x16xf32>
    %14 = arith.addf %12, %13 : vector<256x16xf32>
    %cst_11 = arith.constant 0.000000e+00 : f32
    %15 = vector.broadcast %cst_11 : f32 to vector<256x16xf32>
    %16 = arith.maximumf %14, %15 : vector<256x16xf32>
    %c0_12 = arith.constant 0 : index
    %c0_13 = arith.constant 0 : index
    %17 = vector.load %arg6[%c0_12, %c0_13] : memref<16x128xbf16, #tpu.memory_space<vmem>>, vector<16x128xbf16>
    %c0_14 = arith.constant 0 : index
    %c0_15 = arith.constant 0 : index
    %18 = vector.load %arg7[%c0_14, %c0_15] : memref<1x128xf32, #tpu.memory_space<vmem>>, vector<1x128xf32>
    %19 = arith.truncf %16 : vector<256x16xf32> to vector<256x16xbf16>
    %cst_16 = arith.constant dense<0.000000e+00> : vector<256x128xf32>
    %20 = tpu.matmul %19, %17, %cst_16 {dimension_numbers = #tpu.dot_dimension_numbers<[1], [0], [0], [1], [0, 0, 1, 1], [], []>} : vector<256x16xbf16>, vector<16x128xbf16>, vector<256x128xf32> -> vector<256x128xf32>
    %21 = vector.broadcast %18 : vector<1x128xf32> to vector<256x128xf32>
    %22 = arith.addf %20, %21 : vector<256x128xf32>
    %c0_17 = arith.constant 0 : index
    %c0_18 = arith.constant 0 : index
    %23 = vector.load %arg8[%c0_17, %c0_18] : memref<256x128xf32, #tpu.memory_space<vmem>>, vector<256x128xf32>
    tpu.vector_store %arg8[%c0_17, %c0_18], %22 {strides = array<i32>} : memref<256x128xf32, #tpu.memory_space<vmem>>, vector<256x128xf32>,
    return
  }
  func.func @transform_0(%arg0: i32) -> (i32, i32) {
    %c0_i32 = arith.constant 0 : i32
    %c0_i32_0 = arith.constant 0 : i32
    return %arg0, %c0_i32 : i32, i32
  }
  func.func @transform_1(%arg0: i32) -> (i32, i32) {
    %c0_i32 = arith.constant 0 : i32
    %c0_i32_0 = arith.constant 0 : i32
    %c0_i32_1 = arith.constant 0 : i32
    return %c0_i32, %c0_i32_0 : i32, i32
  }
  func.func @transform_2(%arg0: i32) -> (i32, i32) {
    %c0_i32 = arith.constant 0 : i32
    %c0_i32_0 = arith.constant 0 : i32
    %c0_i32_1 = arith.constant 0 : i32
    return %c0_i32, %c0_i32_0 : i32, i32
  }
  func.func @transform_3(%arg0: i32) -> (i32, i32) {
    %c0_i32 = arith.constant 0 : i32
    %c0_i32_0 = arith.constant 0 : i32
    %c0_i32_1 = arith.constant 0 : i32
    return %c0_i32, %c0_i32_0 : i32, i32
  }
  func.func @transform_4(%arg0: i32) -> (i32, i32) {
    %c0_i32 = arith.constant 0 : i32
    %c0_i32_0 = arith.constant 0 : i32
    %c0_i32_1 = arith.constant 0 : i32
    return %c0_i32, %c0_i32_0 : i32, i32
  }
  func.func @transform_5(%arg0: i32) -> (i32, i32) {
    %c0_i32 = arith.constant 0 : i32
    %c0_i32_0 = arith.constant 0 : i32
    %c0_i32_1 = arith.constant 0 : i32
    return %c0_i32, %c0_i32_0 : i32, i32
  }
  func.func @transform_6(%arg0: i32) -> (i32, i32) {
    %c0_i32 = arith.constant 0 : i32
    %c0_i32_0 = arith.constant 0 : i32
    %c0_i32_1 = arith.constant 0 : i32
    return %c0_i32, %c0_i32_0 : i32, i32
  }
  func.func @transform_7(%arg0: i32) -> (i32, i32) {
    %c0_i32 = arith.constant 0 : i32
    %c0_i32_0 = arith.constant 0 : i32
    return %arg0, %c0_i32 : i32, i32
  }
}

</mosaic_0001>

<llo_original>
// kernel: tpu_custom_call.1
$region0: #{tpu_custom_call.1}
  #allocation0 [shape = 'u32[]', space=smem, size = 0x4, offset = 0x4, fixed_abs, tag = 'smem constant byte address 0x4 - core index']
  #allocation1 [shape = 'u32[144,128]{1,0:T(1,128)}', space=vmem, size = 0x12000, scoped, tag = 'internal scratch']
  %s0 = inlined_call_operand.vmem [shape: f32[512,64], index: 0, kind: input, shape index: {}]
  %s1 = inlined_call_operand.vmem [shape: bf16[64,32], index: 1, kind: input, shape index: {}]
  %s2 = inlined_call_operand.vmem [shape: f32[1,32], index: 2, kind: input, shape index: {}]
  %s3 = inlined_call_operand.vmem [shape: bf16[32,16], index: 3, kind: input, shape index: {}]
  %s4 = inlined_call_operand.vmem [shape: f32[1,16], index: 4, kind: input, shape index: {}]
  %s5 = inlined_call_operand.vmem [shape: bf16[16,128], index: 5, kind: input, shape index: {}]
  %s6 = inlined_call_operand.vmem [shape: f32[1,128], index: 6, kind: input, shape index: {}]
  %s7 = inlined_call_operand.hbm [shape: f32[512,128], index: 7, kind: output, shape index: {}]
  %s8 = sld [smem:[#allocation0]]
  $region61: #{tpu_custom_call.1} parent=0
    _
  %s10 = ssub.s32 1, %s8
  %s11 = scalar_select 0, %s10, %s8
  $region1: #{tpu_custom_call.1} parent=0
    #allocation2 [shape = 'u8[262144]{0}', space=vmem, size = 0x40000, scoped, tag = 'output window, operand 0']
    #allocation3 [shape = 's32[2]{0}', space=sflag, size = 0x8, scoped, tag = 'scoped memory for tpu_custom_call.1']
    %12 = vsyncpa [#allocation3], 0
    %s13 = scalar_lea.sflag [#allocation3], 1
    %14 = vsyncpa %s13, 0
    loop: start=0, step=1, limit=4
    $region2: #{tpu_custom_call.1} parent=1 // loop_pre_header
      _
    $region3: #{tpu_custom_call.1} parent=1 // loop_header
      %s16 = sphi 0, %s20
      %p17 = scmp.ge.s32.totalorder %s16, 4
      %s26 = sphi 0, %s28
      %s29 = sphi 0, %s26
      %s30 = sphi 0, %s29
      %s46 = sphi 0, %s30
      %s50 = sphi 0, %s50
      %s52 = sphi 0, %s50
      %s53 = sphi 0, %s52
      %s67 = sphi 0, %s53
      %s71 = sphi 0, %s71
      %s73 = sphi 0, %s71
      %s74 = sphi 0, %s73
      %s88 = sphi 0, %s74
      %s92 = sphi 0, %s92
      %s94 = sphi 0, %s92
      %s95 = sphi 0, %s94
      %s109 = sphi 0, %s95
      %s113 = sphi 0, %s113
      %s115 = sphi 0, %s113
      %s116 = sphi 0, %s115
      %s130 = sphi 0, %s116
      %s134 = sphi 0, %s134
      %s136 = sphi 0, %s134
      %s137 = sphi 0, %s136
      %s151 = sphi 0, %s137
      %s155 = sphi 0, %s155
      %s157 = sphi 0, %s155
      %s158 = sphi 0, %s157
      %s172 = sphi 0, %s158
      %s178 = sphi 0, %s180
      %s181 = sphi 0, %s178
      %s182 = sphi 0, %s181
      %s198 = sphi 0, %s182
    $region4: #{tpu_custom_call.1} parent=1 // loop_header_branch
      %19 = sbr.rel (%p17) target = $region8
    $region5: #{tpu_custom_call.1} parent=1 // loop_body
      %s21 = ssub.s32 %s16, 1
      %s22 = ssub.s32 %s16, 2
      %s23 = sadd.s32 %s16, 1
      %s24 = ssub.s32 %s16, %s23
      %p25 = scmp.eq.s32.totalorder %s24, 0
      %s27 = sadd.s32 %s26, 1
      %s28 = scalar_select %p25, %s26, %s27
      %p31 = pneg %p25
      %p32 = scmp.eq.s32.totalorder %s16, 1
      %p33 = por %p31, %p32
      %p34 = scmp.ne.s32.totalorder %s26, %s29
      %p35 = scmp.eq.s32.totalorder %s16, 0
      %p36 = por %p34, %p35
      %p37 = scmp.ne.s32.totalorder %s26, %s29
      %p38 = scmp.eq.s32.totalorder %s21, 1
      %p39 = por %p37, %p38
      %p40 = scmp.ne.s32.totalorder %s29, %s30
      %p41 = scmp.eq.s32.totalorder %s21, 0
      %p42 = por %p40, %p41
      %p43 = scmp.ne.s32.totalorder %s29, %s30
      %p44 = scmp.eq.s32.totalorder %s22, 1
      %p45 = por %p43, %p44
      %p47 = scmp.ne.s32.totalorder %s30, %s46
      %p48 = scmp.eq.s32.totalorder %s22, 0
      %p49 = por %p47, %p48
      %s51 = sadd.s32 %s50, 1
      %p54 = scmp.eq.s32.totalorder %s16, 1
      %p55 = scmp.ne.s32.totalorder %s50, %s52
      %p56 = scmp.eq.s32.totalorder %s16, 0
      %p57 = por %p55, %p56
      %p58 = scmp.ne.s32.totalorder %s50, %s52
      %p59 = scmp.eq.s32.totalorder %s21, 1
      %p60 = por %p58, %p59
      %p61 = scmp.ne.s32.totalorder %s52, %s53
      %p62 = scmp.eq.s32.totalorder %s21, 0
      %p63 = por %p61, %p62
      %p64 = scmp.ne.s32.totalorder %s52, %s53
      %p65 = scmp.eq.s32.totalorder %s22, 1
      %p66 = por %p64, %p65
      %p68 = scmp.ne.s32.totalorder %s53, %s67
      %p69 = scmp.eq.s32.totalorder %s22, 0
      %p70 = por %p68, %p69
      %s72 = sadd.s32 %s71, 1
      %p75 = scmp.eq.s32.totalorder %s16, 1
      %p76 = scmp.ne.s32.totalorder %s71, %s73
      %p77 = scmp.eq.s32.totalorder %s16, 0
      %p78 = por %p76, %p77
      %p79 = scmp.ne.s32.totalorder %s71, %s73
      %p80 = scmp.eq.s32.totalorder %s21, 1
      %p81 = por %p79, %p80
      %p82 = scmp.ne.s32.totalorder %s73, %s74
      %p83 = scmp.eq.s32.totalorder %s21, 0
      %p84 = por %p82, %p83
      %p85 = scmp.ne.s32.totalorder %s73, %s74
      %p86 = scmp.eq.s32.totalorder %s22, 1
      %p87 = por %p85, %p86
      %p89 = scmp.ne.s32.totalorder %s74, %s88
      %p90 = scmp.eq.s32.totalorder %s22, 0
      %p91 = por %p89, %p90
      %s93 = sadd.s32 %s92, 1
      %p96 = scmp.eq.s32.totalorder %s16, 1
      %p97 = scmp.ne.s32.totalorder %s92, %s94
      %p98 = scmp.eq.s32.totalorder %s16, 0
      %p99 = por %p97, %p98
      %p100 = scmp.ne.s32.totalorder %s92, %s94
      %p101 = scmp.eq.s32.totalorder %s21, 1
      %p102 = por %p100, %p101
      %p103 = scmp.ne.s32.totalorder %s94, %s95
      %p104 = scmp.eq.s32.totalorder %s21, 0
      %p105 = por %p103, %p104
      %p106 = scmp.ne.s32.totalorder %s94, %s95
      %p107 = scmp.eq.s32.totalorder %s22, 1
      %p108 = por %p106, %p107
      %p110 = scmp.ne.s32.totalorder %s95, %s109
      %p111 = scmp.eq.s32.totalorder %s22, 0
      %p112 = por %p110, %p111
      %s114 = sadd.s32 %s113, 1
      %p117 = scmp.eq.s32.totalorder %s16, 1
      %p118 = scmp.ne.s32.totalorder %s113, %s115
      %p119 = scmp.eq.s32.totalorder %s16, 0
      %p120 = por %p118, %p119
      %p121 = scmp.ne.s32.totalorder %s113, %s115
      %p122 = scmp.eq.s32.totalorder %s21, 1
      %p123 = por %p121, %p122
      %p124 = scmp.ne.s32.totalorder %s115, %s116
      %p125 = scmp.eq.s32.totalorder %s21, 0
      %p126 = por %p124, %p125
      %p127 = scmp.ne.s32.totalorder %s115, %s116
      %p128 = scmp.eq.s32.totalorder %s22, 1
      %p129 = por %p127, %p128
      %p131 = scmp.ne.s32.totalorder %s116, %s130
      %p132 = scmp.eq.s32.totalorder %s22, 0
      %p133 = por %p131, %p132
      %s135 = sadd.s32 %s134, 1
      %p138 = scmp.eq.s32.totalorder %s16, 1
      %p139 = scmp.ne.s32.totalorder %s134, %s136
      %p140 = scmp.eq.s32.totalorder %s16, 0
      %p141 = por %p139, %p140
      %p142 = scmp.ne.s32.totalorder %s134, %s136
      %p143 = scmp.eq.s32.totalorder %s21, 1
      %p144 = por %p142, %p143
      %p145 = scmp.ne.s32.totalorder %s136, %s137
      %p146 = scmp.eq.s32.totalorder %s21, 0
      %p147 = por %p145, %p146
      %p148 = scmp.ne.s32.totalorder %s136, %s137
      %p149 = scmp.eq.s32.totalorder %s22, 1
      %p150 = por %p148, %p149
      %p152 = scmp.ne.s32.totalorder %s137, %s151
      %p153 = scmp.eq.s32.totalorder %s22, 0
      %p154 = por %p152, %p153
      %s156 = sadd.s32 %s155, 1
      %p159 = scmp.eq.s32.totalorder %s16, 1
      %p160 = scmp.ne.s32.totalorder %s155, %s157
      %p161 = scmp.eq.s32.totalorder %s16, 0
      %p162 = por %p160, %p161
      %p163 = scmp.ne.s32.totalorder %s155, %s157
      %p164 = scmp.eq.s32.totalorder %s21, 1
      %p165 = por %p163, %p164
      %p166 = scmp.ne.s32.totalorder %s157, %s158
      %p167 = scmp.eq.s32.totalorder %s21, 0
      %p168 = por %p166, %p167
      %p169 = scmp.ne.s32.totalorder %s157, %s158
      %p170 = scmp.eq.s32.totalorder %s22, 1
      %p171 = por %p169, %p170
      %p173 = scmp.ne.s32.totalorder %s158, %s172
      %p174 = scmp.eq.s32.totalorder %s22, 0
      %p175 = por %p173, %p174
      %s176 = ssub.s32 %s16, %s23
      %p177 = scmp.eq.s32.totalorder %s176, 0
      %s179 = sadd.s32 %s178, 1
      %s180 = scalar_select %p177, %s178, %s179
      %p183 = pneg %p177
      %p184 = scmp.eq.s32.totalorder %s16, 1
      %p185 = por %p183, %p184
      %p186 = scmp.ne.s32.totalorder %s178, %s181
      %p187 = scmp.eq.s32.totalorder %s16, 0
      %p188 = por %p186, %p187
      %p189 = scmp.ne.s32.totalorder %s178, %s181
      %p190 = scmp.eq.s32.totalorder %s21, 1
      %p191 = por %p189, %p190
      %p192 = scmp.ne.s32.totalorder %s181, %s182
      %p193 = scmp.eq.s32.totalorder %s21, 0
      %p194 = por %p192, %p193
      %p195 = scmp.ne.s32.totalorder %s181, %s182
      %p196 = scmp.eq.s32.totalorder %s22, 1
      %p197 = por %p195, %p196
      %p199 = scmp.ne.s32.totalorder %s182, %s198
      %p200 = scmp.eq.s32.totalorder %s22, 0
      %p201 = por %p199, %p200
      %p202 = scmp.le.s32.totalorder 1, %s16
      %p203 = scmp.lt.s32.totalorder %s16, 3
      %p204 = pnand %p202, %p203
      %p205 = pneg %p204
      // Predicated region
      $region9: #{tpu_custom_call.1} parent=5 // pred_check
        _
      $region10: #{tpu_custom_call.1} parent=5 // pred_check_branch
        %207 = sbr.rel (%p204) target = $region12
      $region11: #{tpu_custom_call.1} parent=5 // pred_region
        %s208 = ssub.s32 %s16, 1
        // Predicated region
        $region13: #{tpu_custom_call.1} parent=11 // pred_check
          %p209 = pneg %p63
        $region14: #{tpu_custom_call.1} parent=11 // pred_check_branch
          %211 = sbr.rel (%p209) target = $region16
        $region15: #{tpu_custom_call.1} parent=11 // pred_region
          _
        $region16: #{tpu_custom_call.1} parent=11 // pred_fallthru
          _
        // Predicated region
        $region17: #{tpu_custom_call.1} parent=11 // pred_check
          %p212 = pneg %p84
        $region18: #{tpu_custom_call.1} parent=11 // pred_check_branch
          %214 = sbr.rel (%p212) target = $region20
        $region19: #{tpu_custom_call.1} parent=11 // pred_region
          _
        $region20: #{tpu_custom_call.1} parent=11 // pred_fallthru
          _
        // Predicated region
        $region21: #{tpu_custom_call.1} parent=11 // pred_check
          %p215 = pneg %p105
        $region22: #{tpu_custom_call.1} parent=11 // pred_check_branch
          %217 = sbr.rel (%p215) target = $region24
        $region23: #{tpu_custom_call.1} parent=11 // pred_region
          _
        $region24: #{tpu_custom_call.1} parent=11 // pred_fallthru
          _
        // Predicated region
        $region25: #{tpu_custom_call.1} parent=11 // pred_check
          %p218 = pneg %p126
        $region26: #{tpu_custom_call.1} parent=11 // pred_check_branch
          %220 = sbr.rel (%p218) target = $region28
        $region27: #{tpu_custom_call.1} parent=11 // pred_region
          _
        $region28: #{tpu_custom_call.1} parent=11 // pred_fallthru
          _
        // Predicated region
        $region29: #{tpu_custom_call.1} parent=11 // pred_check
          %p221 = pneg %p147
        $region30: #{tpu_custom_call.1} parent=11 // pred_check_branch
          %223 = sbr.rel (%p221) target = $region32
        $region31: #{tpu_custom_call.1} parent=11 // pred_region
          _
        $region32: #{tpu_custom_call.1} parent=11 // pred_fallthru
          _
        // Predicated region
        $region33: #{tpu_custom_call.1} parent=11 // pred_check
          %p224 = pneg %p168
        $region34: #{tpu_custom_call.1} parent=11 // pred_check_branch
          %226 = sbr.rel (%p224) target = $region36
        $region35: #{tpu_custom_call.1} parent=11 // pred_region
          _
        $region36: #{tpu_custom_call.1} parent=11 // pred_fallthru
          _
      $region12: #{tpu_custom_call.1} parent=5 // pred_fallthru
        _
      %p227 = scmp.lt.s32.totalorder %s16, 2
      // Predicated region
      $region37: #{tpu_custom_call.1} parent=5 // pred_check
        %p228 = pneg %p227
      $region38: #{tpu_custom_call.1} parent=5 // pred_check_branch
        %230 = sbr.rel (%p228) target = $region40
      $region39: #{tpu_custom_call.1} parent=5 // pred_region
        // Predicated region
        $region41: #{tpu_custom_call.1} parent=39 // pred_check
          %p231 = pneg %p36
        $region42: #{tpu_custom_call.1} parent=39 // pred_check_branch
          %233 = sbr.rel (%p231) target = $region44
        $region43: #{tpu_custom_call.1} parent=39 // pred_region
          %s234 = smul.u32 32, %s16
          %p235 = scmp.lt.s32.totalorder %s234, 63
          %s236 = scalar_select %p235, %s234, 63
          %s237 = smul.addr %s236, 8
          %s238 = scalar_lea.vmem %s0, %s237
          %s239 = smul.u32 32, %s16
        $region44: #{tpu_custom_call.1} parent=39 // pred_fallthru
          _
      $region40: #{tpu_custom_call.1} parent=5 // pred_fallthru
        _
      %p240 = scmp.le.s32.totalorder 1, %s16
      %p241 = scmp.lt.s32.totalorder %s16, 3
      %p242 = pnand %p240, %p241
      %p243 = pneg %p242
      // Predicated region
      $region45: #{tpu_custom_call.1} parent=5 // pred_check
        _
      $region46: #{tpu_custom_call.1} parent=5 // pred_check_branch
        %245 = sbr.rel (%p242) target = $region48
      $region47: #{tpu_custom_call.1} parent=5 // pred_region
        %s246 = ssub.s32 %s16, 1
        %s247 = smul.u32 32, %s21
        %p248 = scmp.lt.s32.totalorder %s247, 63
        %s249 = scalar_select %p248, %s247, 63
        %s250 = smul.addr %s249, 8
        %s251 = scalar_lea.vmem %s0, %s250
        %p252 = pneg %p42
        %p253 = pneg %p39
        %p254 = pneg %p63
        %p255 = pneg %p60
        %p256 = pneg %p84
        %p257 = pneg %p81
        %p258 = pneg %p105
        %p259 = pneg %p102
        %p260 = pneg %p126
        %p261 = pneg %p123
        %p262 = pneg %p147
        %p263 = pneg %p144
        %p264 = pneg %p168
        %p265 = pneg %p165
        %p266 = pneg %p194
        %p267 = pneg %p191
        %s268 = sand.u32 %s181, 1
        %s269 = scalar_lea.sflag [#allocation3], %s268
        %s270 = sand.u32 %s181, 1
        %s271 = smul.addr %s270, 256
        %s272 = scalar_lea.vmem [#allocation2], %s271
        %s273 = smul.u32 32, %s21
        %p274 = scmp.lt.s32.totalorder %s273, 63
        %s275 = scalar_select %p274, %s273, 63
        %s276 = smul.addr %s275, 8
        %s277 = scalar_lea.vmem %s0, %s276
        %s278 = smul.u32 32, %s21
        %s279 = smul.u32 32, %s21
        %v281 = vld [vmem:[%s277] sm:$0xff]
        %v282 = vld [vmem:[%s277 + $0x8] sm:$0xff]
        %v283 = vld [vmem:[%s277 + $0x10] sm:$0xff]
        %v284 = vld [vmem:[%s277 + $0x18] sm:$0xff]
        %v285 = vld [vmem:[%s277 + $0x20] sm:$0xff]
        %v286 = vld [vmem:[%s277 + $0x28] sm:$0xff]
        %v287 = vld [vmem:[%s277 + $0x30] sm:$0xff]
        %v288 = vld [vmem:[%s277 + $0x38] sm:$0xff]
        %v289 = vld [vmem:[%s277 + $0x40] sm:$0xff]
        %v290 = vld [vmem:[%s277 + $0x48] sm:$0xff]
        %v291 = vld [vmem:[%s277 + $0x50] sm:$0xff]
        %v292 = vld [vmem:[%s277 + $0x58] sm:$0xff]
        %v293 = vld [vmem:[%s277 + $0x60] sm:$0xff]
        %v294 = vld [vmem:[%s277 + $0x68] sm:$0xff]
        %v295 = vld [vmem:[%s277 + $0x70] sm:$0xff]
        %v296 = vld [vmem:[%s277 + $0x78] sm:$0xff]
        %v297 = vld [vmem:[%s277 + $0x80] sm:$0xff]
        %v298 = vld [vmem:[%s277 + $0x88] sm:$0xff]
        %v299 = vld [vmem:[%s277 + $0x90] sm:$0xff]
        %v300 = vld [vmem:[%s277 + $0x98] sm:$0xff]
        %v301 = vld [vmem:[%s277 + $0xa0] sm:$0xff]
        %v302 = vld [vmem:[%s277 + $0xa8] sm:$0xff]
        %v303 = vld [vmem:[%s277 + $0xb0] sm:$0xff]
        %v304 = vld [vmem:[%s277 + $0xb8] sm:$0xff]
        %v305 = vld [vmem:[%s277 + $0xc0] sm:$0xff]
        %v306 = vld [vmem:[%s277 + $0xc8] sm:$0xff]
        %v307 = vld [vmem:[%s277 + $0xd0] sm:$0xff]
        %v308 = vld [vmem:[%s277 + $0xd8] sm:$0xff]
        %v309 = vld [vmem:[%s277 + $0xe0] sm:$0xff]
        %v310 = vld [vmem:[%s277 + $0xe8] sm:$0xff]
        %v311 = vld [vmem:[%s277 + $0xf0] sm:$0xff]
        %v312 = vld [vmem:[%s277 + $0xf8] sm:$0xff]
        %v313 = vld [vmem:[%s1] sm:$0xf]
        %v314 = vld [vmem:[%s1 + $0x4] sm:$0xf]
        %v315 = vld [vmem:[%s1 + $0x8] sm:$0xf]
        %v316 = vld [vmem:[%s1 + $0xc] sm:$0xf]
        %v317 = vld [vmem:[%s1 + $0x10] sm:$0xf]
        %v318 = vld [vmem:[%s1 + $0x14] sm:$0xf]
        %v319 = vld [vmem:[%s1 + $0x18] sm:$0xf]
        %v320 = vld [vmem:[%s1 + $0x1c] sm:$0xf]
        %v321 = vld [vmem:[%s2] sm:$0x1]
        %v322 = vpack.c.bf16 %v282, %v281
        %v323 = vpack.c.bf16 %v284, %v283
        %v324 = vpack.c.bf16 %v286, %v285
        %v325 = vpack.c.bf16 %v288, %v287
        %v326 = vpack.c.bf16 %v290, %v289
        %v327 = vpack.c.bf16 %v292, %v291
        %v328 = vpack.c.bf16 %v294, %v293
        %v329 = vpack.c.bf16 %v296, %v295
        %v330 = vpack.c.bf16 %v298, %v297
        %v331 = vpack.c.bf16 %v300, %v299
        %v332 = vpack.c.bf16 %v302, %v301
        %v333 = vpack.c.bf16 %v304, %v303
        %v334 = vpack.c.bf16 %v306, %v305
        %v335 = vpack.c.bf16 %v308, %v307
        %v336 = vpack.c.bf16 %v310, %v309
        %v337 = vpack.c.bf16 %v312, %v311
        %v339 = vlaneseq
        %v340 = vshrl.u32 %v339, 7
        %v341 = vsub.s32 0, %v340
        %v342 = vrot.slane %v321, %v341
        %v352 = vunpack.c.l.b16 %v313
        %v353 = vunpack.c.l.b16 %v314
        %v354 = vunpack.c.l.b16 %v315
        %v355 = vunpack.c.l.b16 %v316
        %v356 = vunpack.c.l.b16 %v317
        %v357 = vunpack.c.l.b16 %v318
        %v358 = vunpack.c.l.b16 %v319
        %v359 = vunpack.c.l.b16 %v320
        %v360 = vpack.c.b16 %v353, %v352
        %v361 = vpack.c.b16 %v355, %v354
        %v362 = vpack.c.b16 %v357, %v356
        %v363 = vpack.c.b16 %v359, %v358
        %vm368 = vcmask 523264
        %v370 = vsel %vm368, %v322, 0
        %v373 = vsel %vm368, %v323, 0
        %v376 = vsel %vm368, %v324, 0
        %v379 = vsel %vm368, %v325, 0
        %v382 = vsel %vm368, %v326, 0
        %v385 = vsel %vm368, %v327, 0
        %v388 = vsel %vm368, %v328, 0
        %v391 = vsel %vm368, %v329, 0
        %v394 = vsel %vm368, %v330, 0
        %v397 = vsel %vm368, %v331, 0
        %v400 = vsel %vm368, %v332, 0
        %v403 = vsel %vm368, %v333, 0
        %v406 = vsel %vm368, %v334, 0
        %v409 = vsel %vm368, %v335, 0
        %v412 = vsel %vm368, %v336, 0
        %v415 = vsel %vm368, %v337, 0
        %417 = vmatprep.subr.bf16.mxu0 0
        %418 = vmatpush1.bf16.msra.mxu0 %v360
        %419 = vmatprep.subr.bf16.mxu0 0
        %420 = vmatpush1.bf16.msra.mxu0 %v361
        %421 = vmatprep.subr.bf16.mxu0 0
        %422 = vmatpush1.bf16.msra.mxu0 %v362
        %423 = vmatprep.subr.bf16.mxu0 0
        %424 = vmatpush1.bf16.msra.mxu0 %v363
        %425 = vmatprep.subr.bf16.mxu0 0
        %426 = vmatpush1.bf16.msra.mxu0 0
        %427 = vmatprep.subr.bf16.mxu0 0
        %428 = vmatpush1.bf16.msra.mxu0 0
        %429 = vmatprep.subr.bf16.mxu0 0
        %430 = vmatpush1.bf16.msra.mxu0 0
        %431 = vmatprep.subr.bf16.mxu0 0
        %432 = vmatpush1.bf16.msra.mxu0 0
        %433 = vmatprep.subr.bf16.mxu0 0
        %434 = vmatpush1.bf16.msra.mxu0 0
        %435 = vmatprep.subr.bf16.mxu0 0
        %436 = vmatpush1.bf16.msra.mxu0 0
        %437 = vmatprep.subr.bf16.mxu0 0
        %438 = vmatpush1.bf16.msra.mxu0 0
        %439 = vmatprep.subr.bf16.mxu0 0
        %440 = vmatpush1.bf16.msra.mxu0 0
        %441 = vmatprep.subr.bf16.mxu0 0
        %442 = vmatpush1.bf16.msra.mxu0 0
        %443 = vmatprep.subr.bf16.mxu0 0
        %444 = vmatpush1.bf16.msra.mxu0 0
        %445 = vmatprep.subr.bf16.mxu0 0
        %446 = vmatpush1.bf16.msra.mxu0 0
        %447 = vmatprep.subr.bf16.mxu0 0
        %448 = vmatpush1.bf16.msra.mxu0 0
        %449 = vmatprep.mubr.bf16.mxu0 0
        %450 = vmatmul.mubr.bf16.gmra.mrb[0].mxu0 %v370
        %v451 = vpop.f32.mrb[0].mxu0
        %v452 = vadd.f32 %v342, %v451
        %v453 = vpop.f32.mrb[0].mxu0
        %v454 = vpop.f32.mrb[0].mxu0
        %v455 = vadd.f32 %v342, %v454
        %v456 = vpop.f32.mrb[0].mxu0
        %457 = vmatprep.mubr.bf16.mxu0 0
        %458 = vmatmul.mubr.bf16.gmra.mrb[0].mxu0 %v373
        %v459 = vpop.f32.mrb[0].mxu0
        %v460 = vadd.f32 %v342, %v459
        %v461 = vpop.f32.mrb[0].mxu0
        %v462 = vpop.f32.mrb[0].mxu0
        %v463 = vadd.f32 %v342, %v462
        %v464 = vpop.f32.mrb[0].mxu0
        %465 = vmatprep.mubr.bf16.mxu0 0
        %466 = vmatmul.mubr.bf16.gmra.mrb[0].mxu0 %v376
        %v467 = vpop.f32.mrb[0].mxu0
        %v468 = vadd.f32 %v342, %v467
        %v469 = vpop.f32.mrb[0].mxu0
        %v470 = vpop.f32.mrb[0].mxu0
        %v471 = vadd.f32 %v342, %v470
        %v472 = vpop.f32.mrb[0].mxu0
        %473 = vmatprep.mubr.bf16.mxu0 0
        %474 = vmatmul.mubr.bf16.gmra.mrb[0].mxu0 %v379
        %v475 = vpop.f32.mrb[0].mxu0
        %v476 = vadd.f32 %v342, %v475
        %v477 = vpop.f32.mrb[0].mxu0
        %v478 = vpop.f32.mrb[0].mxu0
        %v479 = vadd.f32 %v342, %v478
        %v480 = vpop.f32.mrb[0].mxu0
        %481 = vmatprep.mubr.bf16.mxu0 0
        %482 = vmatmul.mubr.bf16.gmra.mrb[0].mxu0 %v382
        %v483 = vpop.f32.mrb[0].mxu0
        %v484 = vadd.f32 %v342, %v483
        %v485 = vpop.f32.mrb[0].mxu0
        %v486 = vpop.f32.mrb[0].mxu0
        %v487 = vadd.f32 %v342, %v486
        %v488 = vpop.f32.mrb[0].mxu0
        %489 = vmatprep.mubr.bf16.mxu0 0
        %490 = vmatmul.mubr.bf16.gmra.mrb[0].mxu0 %v385
        %v491 = vpop.f32.mrb[0].mxu0
        %v492 = vadd.f32 %v342, %v491
        %v493 = vpop.f32.mrb[0].mxu0
        %v494 = vpop.f32.mrb[0].mxu0
        %v495 = vadd.f32 %v342, %v494
        %v496 = vpop.f32.mrb[0].mxu0
        %497 = vmatprep.mubr.bf16.mxu0 0
        %498 = vmatmul.mubr.bf16.gmra.mrb[0].mxu0 %v388
        %v499 = vpop.f32.mrb[0].mxu0
        %v500 = vadd.f32 %v342, %v499
        %v501 = vpop.f32.mrb[0].mxu0
        %v502 = vpop.f32.mrb[0].mxu0
        %v503 = vadd.f32 %v342, %v502
        %v504 = vpop.f32.mrb[0].mxu0
        %505 = vmatprep.mubr.bf16.mxu0 0
        %506 = vmatmul.mubr.bf16.gmra.mrb[0].mxu0 %v391
        %v507 = vpop.f32.mrb[0].mxu0
        %v508 = vadd.f32 %v342, %v507
        %v509 = vpop.f32.mrb[0].mxu0
        %v510 = vpop.f32.mrb[0].mxu0
        %v511 = vadd.f32 %v342, %v510
        %v512 = vpop.f32.mrb[0].mxu0
        %513 = vmatprep.mubr.bf16.mxu0 0
        %514 = vmatmul.mubr.bf16.gmra.mrb[0].mxu0 %v394
        %v515 = vpop.f32.mrb[0].mxu0
        %v516 = vadd.f32 %v342, %v515
        %v517 = vpop.f32.mrb[0].mxu0
        %v518 = vpop.f32.mrb[0].mxu0
        %v519 = vadd.f32 %v342, %v518
        %v520 = vpop.f32.mrb[0].mxu0
        %521 = vmatprep.mubr.bf16.mxu0 0
        %522 = vmatmul.mubr.bf16.gmra.mrb[0].mxu0 %v397
        %v523 = vpop.f32.mrb[0].mxu0
        %v524 = vadd.f32 %v342, %v523
        %v525 = vpop.f32.mrb[0].mxu0
        %v526 = vpop.f32.mrb[0].mxu0
        %v527 = vadd.f32 %v342, %v526
        %v528 = vpop.f32.mrb[0].mxu0
        %529 = vmatprep.mubr.bf16.mxu0 0
        %530 = vmatmul.mubr.bf16.gmra.mrb[0].mxu0 %v400
        %v531 = vpop.f32.mrb[0].mxu0
        %v532 = vadd.f32 %v342, %v531
        %v533 = vpop.f32.mrb[0].mxu0
        %v534 = vpop.f32.mrb[0].mxu0
        %v535 = vadd.f32 %v342, %v534
        %v536 = vpop.f32.mrb[0].mxu0
        %537 = vmatprep.mubr.bf16.mxu0 0
        %538 = vmatmul.mubr.bf16.gmra.mrb[0].mxu0 %v403
        %v539 = vpop.f32.mrb[0].mxu0
        %v540 = vadd.f32 %v342, %v539
        %v541 = vpop.f32.mrb[0].mxu0
        %v542 = vpop.f32.mrb[0].mxu0
        %v543 = vadd.f32 %v342, %v542
        %v544 = vpop.f32.mrb[0].mxu0
        %545 = vmatprep.mubr.bf16.mxu0 0
        %546 = vmatmul.mubr.bf16.gmra.mrb[0].mxu0 %v406
        %v547 = vpop.f32.mrb[0].mxu0
        %v548 = vadd.f32 %v342, %v547
        %v549 = vpop.f32.mrb[0].mxu0
        %v550 = vpop.f32.mrb[0].mxu0
        %v551 = vadd.f32 %v342, %v550
        %v552 = vpop.f32.mrb[0].mxu0
        %553 = vmatprep.mubr.bf16.mxu0 0
        %554 = vmatmul.mubr.bf16.gmra.mrb[0].mxu0 %v409
        %v555 = vpop.f32.mrb[0].mxu0
        %v556 = vadd.f32 %v342, %v555
        %v557 = vpop.f32.mrb[0].mxu0
        %v558 = vpop.f32.mrb[0].mxu0
        %v559 = vadd.f32 %v342, %v558
        %v560 = vpop.f32.mrb[0].mxu0
        %561 = vmatprep.mubr.bf16.mxu0 0
        %562 = vmatmul.mubr.bf16.gmra.mrb[0].mxu0 %v412
        %v563 = vpop.f32.mrb[0].mxu0
        %v564 = vadd.f32 %v342, %v563
        %v565 = vpop.f32.mrb[0].mxu0
        %v566 = vpop.f32.mrb[0].mxu0
        %v567 = vadd.f32 %v342, %v566
        %v568 = vpop.f32.mrb[0].mxu0
        %569 = vmatprep.mubr.bf16.mxu0 0
        %570 = vmatmul.mubr.bf16.gmra.mrb[0].mxu0 %v415
        %v571 = vpop.f32.mrb[0].mxu0
        %v572 = vadd.f32 %v342, %v571
        %v573 = vpop.f32.mrb[0].mxu0
        %v574 = vpop.f32.mrb[0].mxu0
        %v575 = vadd.f32 %v342, %v574
        %v576 = vpop.f32.mrb[0].mxu0
        %577 = vdwg.mxu0
        %v578 = vmax.f32 %v452, 0.0
        %v579 = vmax.f32 %v455, 0.0
        %v580 = vmax.f32 %v460, 0.0
        %v581 = vmax.f32 %v463, 0.0
        %v582 = vmax.f32 %v468, 0.0
        %v583 = vmax.f32 %v471, 0.0
        %v584 = vmax.f32 %v476, 0.0
        %v585 = vmax.f32 %v479, 0.0
        %v586 = vmax.f32 %v484, 0.0
        %v587 = vmax.f32 %v487, 0.0
        %v588 = vmax.f32 %v492, 0.0
        %v589 = vmax.f32 %v495, 0.0
        %v590 = vmax.f32 %v500, 0.0
        %v591 = vmax.f32 %v503, 0.0
        %v592 = vmax.f32 %v508, 0.0
        %v593 = vmax.f32 %v511, 0.0
        %v594 = vmax.f32 %v516, 0.0
        %v595 = vmax.f32 %v519, 0.0
        %v596 = vmax.f32 %v524, 0.0
        %v597 = vmax.f32 %v527, 0.0
        %v598 = vmax.f32 %v532, 0.0
        %v599 = vmax.f32 %v535, 0.0
        %v600 = vmax.f32 %v540, 0.0
        %v601 = vmax.f32 %v543, 0.0
        %v602 = vmax.f32 %v548, 0.0
        %v603 = vmax.f32 %v551, 0.0
        %v604 = vmax.f32 %v556, 0.0
        %v605 = vmax.f32 %v559, 0.0
        %v606 = vmax.f32 %v564, 0.0
        %v607 = vmax.f32 %v567, 0.0
        %v608 = vmax.f32 %v572, 0.0
        %v609 = vmax.f32 %v575, 0.0
        %v610 = vld [vmem:[%s3] sm:$0xf]
        %v611 = vld [vmem:[%s3 + $0x4] sm:$0xf]
        %v612 = vld [vmem:[%s3 + $0x8] sm:$0xf]
        %v613 = vld [vmem:[%s3 + $0xc] sm:$0xf]
        %v614 = vld [vmem:[%s4] sm:$0x1]
        %v615 = vpack.c.bf16 %v579, %v578
        %v616 = vpack.c.bf16 %v581, %v580
        %v617 = vpack.c.bf16 %v583, %v582
        %v618 = vpack.c.bf16 %v585, %v584
        %v619 = vpack.c.bf16 %v587, %v586
        %v620 = vpack.c.bf16 %v589, %v588
        %v621 = vpack.c.bf16 %v591, %v590
        %v622 = vpack.c.bf16 %v593, %v592
        %v623 = vpack.c.bf16 %v595, %v594
        %v624 = vpack.c.bf16 %v597, %v596
        %v625 = vpack.c.bf16 %v599, %v598
        %v626 = vpack.c.bf16 %v601, %v600
        %v627 = vpack.c.bf16 %v603, %v602
        %v628 = vpack.c.bf16 %v605, %v604
        %v629 = vpack.c.bf16 %v607, %v606
        %v630 = vpack.c.bf16 %v609, %v608
        %v632 = vlaneseq
        %v633 = vshrl.u32 %v632, 7
        %v634 = vsub.s32 0, %v633
        %v635 = vrot.slane %v614, %v634
        %v641 = vunpack.c.l.b16 %v610
        %v642 = vunpack.c.l.b16 %v611
        %v643 = vunpack.c.l.b16 %v612
        %v644 = vunpack.c.l.b16 %v613
        %v645 = vpack.c.b16 %v642, %v641
        %v646 = vpack.c.b16 %v644, %v643
        %vm649 = vcmask 261120
        %v651 = vsel %vm649, %v615, 0
        %v654 = vsel %vm649, %v616, 0
        %v657 = vsel %vm649, %v617, 0
        %v660 = vsel %vm649, %v618, 0
        %v663 = vsel %vm649, %v619, 0
        %v666 = vsel %vm649, %v620, 0
        %v669 = vsel %vm649, %v621, 0
        %v672 = vsel %vm649, %v622, 0
        %v675 = vsel %vm649, %v623, 0
        %v678 = vsel %vm649, %v624, 0
        %v681 = vsel %vm649, %v625, 0
        %v684 = vsel %vm649, %v626, 0
        %v687 = vsel %vm649, %v627, 0
        %v690 = vsel %vm649, %v628, 0
        %v693 = vsel %vm649, %v629, 0
        %v696 = vsel %vm649, %v630, 0
        %698 = vmatprep.subr.bf16.mxu0 0
        %699 = vmatpush1.bf16.msra.mxu0 %v645
        %700 = vmatprep.subr.bf16.mxu0 0
        %701 = vmatpush1.bf16.msra.mxu0 %v646
        %702 = vmatprep.subr.bf16.mxu0 0
        %703 = vmatpush1.bf16.msra.mxu0 0
        %704 = vmatprep.subr.bf16.mxu0 0
        %705 = vmatpush1.bf16.msra.mxu0 0
        %706 = vmatprep.subr.bf16.mxu0 0
        %707 = vmatpush1.bf16.msra.mxu0 0
        %708 = vmatprep.subr.bf16.mxu0 0
        %709 = vmatpush1.bf16.msra.mxu0 0
        %710 = vmatprep.subr.bf16.mxu0 0
        %711 = vmatpush1.bf16.msra.mxu0 0
        %712 = vmatprep.subr.bf16.mxu0 0
        %713 = vmatpush1.bf16.msra.mxu0 0
        %714 = vmatprep.subr.bf16.mxu0 0
        %715 = vmatpush1.bf16.msra.mxu0 0
        %716 = vmatprep.subr.bf16.mxu0 0
        %717 = vmatpush1.bf16.msra.mxu0 0
        %718 = vmatprep.subr.bf16.mxu0 0
        %719 = vmatpush1.bf16.msra.mxu0 0
        %720 = vmatprep.subr.bf16.mxu0 0
        %721 = vmatpush1.bf16.msra.mxu0 0
        %722 = vmatprep.subr.bf16.mxu0 0
        %723 = vmatpush1.bf16.msra.mxu0 0
        %724 = vmatprep.subr.bf16.mxu0 0
        %725 = vmatpush1.bf16.msra.mxu0 0
        %726 = vmatprep.subr.bf16.mxu0 0
        %727 = vmatpush1.bf16.msra.mxu0 0
        %728 = vmatprep.subr.bf16.mxu0 0
        %729 = vmatpush1.bf16.msra.mxu0 0
        %730 = vmatprep.mubr.bf16.mxu0 0
        %731 = vmatmul.mubr.bf16.gmra.mrb[0].mxu0 %v651
        %v732 = vpop.f32.mrb[0].mxu0
        %v733 = vadd.f32 %v635, %v732
        %v734 = vpop.f32.mrb[0].mxu0
        %v735 = vpop.f32.mrb[0].mxu0
        %v736 = vadd.f32 %v635, %v735
        %v737 = vpop.f32.mrb[0].mxu0
        %738 = vmatprep.mubr.bf16.mxu0 0
        %739 = vmatmul.mubr.bf16.gmra.mrb[0].mxu0 %v654
        %v740 = vpop.f32.mrb[0].mxu0
        %v741 = vadd.f32 %v635, %v740
        %v742 = vpop.f32.mrb[0].mxu0
        %v743 = vpop.f32.mrb[0].mxu0
        %v744 = vadd.f32 %v635, %v743
        %v745 = vpop.f32.mrb[0].mxu0
        %746 = vmatprep.mubr.bf16.mxu0 0
        %747 = vmatmul.mubr.bf16.gmra.mrb[0].mxu0 %v657
        %v748 = vpop.f32.mrb[0].mxu0
        %v749 = vadd.f32 %v635, %v748
        %v750 = vpop.f32.mrb[0].mxu0
        %v751 = vpop.f32.mrb[0].mxu0
        %v752 = vadd.f32 %v635, %v751
        %v753 = vpop.f32.mrb[0].mxu0
        %754 = vmatprep.mubr.bf16.mxu0 0
        %755 = vmatmul.mubr.bf16.gmra.mrb[0].mxu0 %v660
        %v756 = vpop.f32.mrb[0].mxu0
        %v757 = vadd.f32 %v635, %v756
        %v758 = vpop.f32.mrb[0].mxu0
        %v759 = vpop.f32.mrb[0].mxu0
        %v760 = vadd.f32 %v635, %v759
        %v761 = vpop.f32.mrb[0].mxu0
        %762 = vmatprep.mubr.bf16.mxu0 0
        %763 = vmatmul.mubr.bf16.gmra.mrb[0].mxu0 %v663
        %v764 = vpop.f32.mrb[0].mxu0
        %v765 = vadd.f32 %v635, %v764
        %v766 = vpop.f32.mrb[0].mxu0
        %v767 = vpop.f32.mrb[0].mxu0
        %v768 = vadd.f32 %v635, %v767
        %v769 = vpop.f32.mrb[0].mxu0
        %770 = vmatprep.mubr.bf16.mxu0 0
        %771 = vmatmul.mubr.bf16.gmra.mrb[0].mxu0 %v666
        %v772 = vpop.f32.mrb[0].mxu0
        %v773 = vadd.f32 %v635, %v772
        %v774 = vpop.f32.mrb[0].mxu0
        %v775 = vpop.f32.mrb[0].mxu0
        %v776 = vadd.f32 %v635, %v775
        %v777 = vpop.f32.mrb[0].mxu0
        %778 = vmatprep.mubr.bf16.mxu0 0
        %779 = vmatmul.mubr.bf16.gmra.mrb[0].mxu0 %v669
        %v780 = vpop.f32.mrb[0].mxu0
        %v781 = vadd.f32 %v635, %v780
        %v782 = vpop.f32.mrb[0].mxu0
        %v783 = vpop.f32.mrb[0].mxu0
        %v784 = vadd.f32 %v635, %v783
        %v785 = vpop.f32.mrb[0].mxu0
        %786 = vmatprep.mubr.bf16.mxu0 0
        %787 = vmatmul.mubr.bf16.gmra.mrb[0].mxu0 %v672
        %v788 = vpop.f32.mrb[0].mxu0
        %v789 = vadd.f32 %v635, %v788
        %v790 = vpop.f32.mrb[0].mxu0
        %v791 = vpop.f32.mrb[0].mxu0
        %v792 = vadd.f32 %v635, %v791
        %v793 = vpop.f32.mrb[0].mxu0
        %794 = vmatprep.mubr.bf16.mxu0 0
        %795 = vmatmul.mubr.bf16.gmra.mrb[0].mxu0 %v675
        %v796 = vpop.f32.mrb[0].mxu0
        %v797 = vadd.f32 %v635, %v796
        %v798 = vpop.f32.mrb[0].mxu0
        %v799 = vpop.f32.mrb[0].mxu0
        %v800 = vadd.f32 %v635, %v799
        %v801 = vpop.f32.mrb[0].mxu0
        %802 = vmatprep.mubr.bf16.mxu0 0
        %803 = vmatmul.mubr.bf16.gmra.mrb[0].mxu0 %v678
        %v804 = vpop.f32.mrb[0].mxu0
        %v805 = vadd.f32 %v635, %v804
        %v806 = vpop.f32.mrb[0].mxu0
        %v807 = vpop.f32.mrb[0].mxu0
        %v808 = vadd.f32 %v635, %v807
        %v809 = vpop.f32.mrb[0].mxu0
        %810 = vmatprep.mubr.bf16.mxu0 0
        %811 = vmatmul.mubr.bf16.gmra.mrb[0].mxu0 %v681
        %v812 = vpop.f32.mrb[0].mxu0
        %v813 = vadd.f32 %v635, %v812
        %v814 = vpop.f32.mrb[0].mxu0
        %v815 = vpop.f32.mrb[0].mxu0
        %v816 = vadd.f32 %v635, %v815
        %v817 = vpop.f32.mrb[0].mxu0
        %818 = vmatprep.mubr.bf16.mxu0 0
        %819 = vmatmul.mubr.bf16.gmra.mrb[0].mxu0 %v684
        %v820 = vpop.f32.mrb[0].mxu0
        %v821 = vadd.f32 %v635, %v820
        %v822 = vpop.f32.mrb[0].mxu0
        %v823 = vpop.f32.mrb[0].mxu0
        %v824 = vadd.f32 %v635, %v823
        %v825 = vpop.f32.mrb[0].mxu0
        %826 = vmatprep.mubr.bf16.mxu0 0
        %827 = vmatmul.mubr.bf16.gmra.mrb[0].mxu0 %v687
        %v828 = vpop.f32.mrb[0].mxu0
        %v829 = vadd.f32 %v635, %v828
        %v830 = vpop.f32.mrb[0].mxu0
        %v831 = vpop.f32.mrb[0].mxu0
        %v832 = vadd.f32 %v635, %v831
        %v833 = vpop.f32.mrb[0].mxu0
        %834 = vmatprep.mubr.bf16.mxu0 0
        %835 = vmatmul.mubr.bf16.gmra.mrb[0].mxu0 %v690
        %v836 = vpop.f32.mrb[0].mxu0
        %v837 = vadd.f32 %v635, %v836
        %v838 = vpop.f32.mrb[0].mxu0
        %v839 = vpop.f32.mrb[0].mxu0
        %v840 = vadd.f32 %v635, %v839
        %v841 = vpop.f32.mrb[0].mxu0
        %842 = vmatprep.mubr.bf16.mxu0 0
        %843 = vmatmul.mubr.bf16.gmra.mrb[0].mxu0 %v693
        %v844 = vpop.f32.mrb[0].mxu0
        %v845 = vadd.f32 %v635, %v844
        %v846 = vpop.f32.mrb[0].mxu0
        %v847 = vpop.f32.mrb[0].mxu0
        %v848 = vadd.f32 %v635, %v847
        %v849 = vpop.f32.mrb[0].mxu0
        %850 = vmatprep.mubr.bf16.mxu0 0
        %851 = vmatmul.mubr.bf16.gmra.mrb[0].mxu0 %v696
        %v852 = vpop.f32.mrb[0].mxu0
        %v853 = vadd.f32 %v635, %v852
        %v854 = vpop.f32.mrb[0].mxu0
        %v855 = vpop.f32.mrb[0].mxu0
        %v856 = vadd.f32 %v635, %v855
        %v857 = vpop.f32.mrb[0].mxu0
        %858 = vdwg.mxu0
        %v859 = vmax.f32 %v733, 0.0
        %v860 = vmax.f32 %v736, 0.0
        %v861 = vmax.f32 %v741, 0.0
        %v862 = vmax.f32 %v744, 0.0
        %v863 = vmax.f32 %v749, 0.0
        %v864 = vmax.f32 %v752, 0.0
        %v865 = vmax.f32 %v757, 0.0
        %v866 = vmax.f32 %v760, 0.0
        %v867 = vmax.f32 %v765, 0.0
        %v868 = vmax.f32 %v768, 0.0
        %v869 = vmax.f32 %v773, 0.0
        %v870 = vmax.f32 %v776, 0.0
        %v871 = vmax.f32 %v781, 0.0
        %v872 = vmax.f32 %v784, 0.0
        %v873 = vmax.f32 %v789, 0.0
        %v874 = vmax.f32 %v792, 0.0
        %v875 = vmax.f32 %v797, 0.0
        %v876 = vmax.f32 %v800, 0.0
        %v877 = vmax.f32 %v805, 0.0
        %v878 = vmax.f32 %v808, 0.0
        %v879 = vmax.f32 %v813, 0.0
        %v880 = vmax.f32 %v816, 0.0
        %v881 = vmax.f32 %v821, 0.0
        %v882 = vmax.f32 %v824, 0.0
        %v883 = vmax.f32 %v829, 0.0
        %v884 = vmax.f32 %v832, 0.0
        %v885 = vmax.f32 %v837, 0.0
        %v886 = vmax.f32 %v840, 0.0
        %v887 = vmax.f32 %v845, 0.0
        %v888 = vmax.f32 %v848, 0.0
        %v889 = vmax.f32 %v853, 0.0
        %v890 = vmax.f32 %v856, 0.0
        %v891 = vld [vmem:[%s5] sm:$0xf]
        %v892 = vld [vmem:[%s5 + $0x4] sm:$0xf]
        %v893 = vld [vmem:[%s6] sm:$0x1]
        %v894 = vpack.c.bf16 %v860, %v859
        %v895 = vpack.c.bf16 %v862, %v861
        %v896 = vpack.c.bf16 %v864, %v863
        %v897 = vpack.c.bf16 %v866, %v865
        %v898 = vpack.c.bf16 %v868, %v867
        %v899 = vpack.c.bf16 %v870, %v869
        %v900 = vpack.c.bf16 %v872, %v871
        %v901 = vpack.c.bf16 %v874, %v873
        %v902 = vpack.c.bf16 %v876, %v875
        %v903 = vpack.c.bf16 %v878, %v877
        %v904 = vpack.c.bf16 %v880, %v879
        %v905 = vpack.c.bf16 %v882, %v881
        %v906 = vpack.c.bf16 %v884, %v883
        %v907 = vpack.c.bf16 %v886, %v885
        %v908 = vpack.c.bf16 %v888, %v887
        %v909 = vpack.c.bf16 %v890, %v889
        %v911 = vlaneseq
        %v912 = vshrl.u32 %v911, 7
        %v913 = vsub.s32 0, %v912
        %v914 = vrot.slane %v893, %v913
        %v918 = vunpack.c.l.b16 %v891
        %v919 = vunpack.c.l.b16 %v892
        %v920 = vpack.c.b16 %v919, %v918
        %vm922 = vcmask 130048
        %v924 = vsel %vm922, %v894, 0
        %v927 = vsel %vm922, %v895, 0
        %v930 = vsel %vm922, %v896, 0
        %v933 = vsel %vm922, %v897, 0
        %v936 = vsel %vm922, %v898, 0
        %v939 = vsel %vm922, %v899, 0
        %v942 = vsel %vm922, %v900, 0
        %v945 = vsel %vm922, %v901, 0
        %v948 = vsel %vm922, %v902, 0
        %v951 = vsel %vm922, %v903, 0
        %v954 = vsel %vm922, %v904, 0
        %v957 = vsel %vm922, %v905, 0
        %v960 = vsel %vm922, %v906, 0
        %v963 = vsel %vm922, %v907, 0
        %v966 = vsel %vm922, %v908, 0
        %v969 = vsel %vm922, %v909, 0
        %971 = vmatprep.subr.bf16.mxu0 0
        %972 = vmatpush1.bf16.msra.mxu0 %v920
        %973 = vmatprep.subr.bf16.mxu0 0
        %974 = vmatpush1.bf16.msra.mxu0 0
        %975 = vmatprep.subr.bf16.mxu0 0
        %976 = vmatpush1.bf16.msra.mxu0 0
        %977 = vmatprep.subr.bf16.mxu0 0
        %978 = vmatpush1.bf16.msra.mxu0 0
        %979 = vmatprep.subr.bf16.mxu0 0
        %980 = vmatpush1.bf16.msra.mxu0 0
        %981 = vmatprep.subr.bf16.mxu0 0
        %982 = vmatpush1.bf16.msra.mxu0 0
        %983 = vmatprep.subr.bf16.mxu0 0
        %984 = vmatpush1.bf16.msra.mxu0 0
        %985 = vmatprep.subr.bf16.mxu0 0
        %986 = vmatpush1.bf16.msra.mxu0 0
        %987 = vmatprep.subr.bf16.mxu0 0
        %988 = vmatpush1.bf16.msra.mxu0 0
        %989 = vmatprep.subr.bf16.mxu0 0
        %990 = vmatpush1.bf16.msra.mxu0 0
        %991 = vmatprep.subr.bf16.mxu0 0
        %992 = vmatpush1.bf16.msra.mxu0 0
        %993 = vmatprep.subr.bf16.mxu0 0
        %994 = vmatpush1.bf16.msra.mxu0 0
        %995 = vmatprep.subr.bf16.mxu0 0
        %996 = vmatpush1.bf16.msra.mxu0 0
        %997 = vmatprep.subr.bf16.mxu0 0
        %998 = vmatpush1.bf16.msra.mxu0 0
        %999 = vmatprep.subr.bf16.mxu0 0
        %1000 = vmatpush1.bf16.msra.mxu0 0
        %1001 = vmatprep.subr.bf16.mxu0 0
        %1002 = vmatpush1.bf16.msra.mxu0 0
        %1003 = vmatprep.mubr.bf16.mxu0 0
        %1004 = vmatmul.mubr.bf16.gmra.mrb[0].mxu0 %v924
        %v1005 = vpop.f32.mrb[0].mxu0
        %v1006 = vadd.f32 %v914, %v1005
        %v1007 = vpop.f32.mrb[0].mxu0
        %v1008 = vpop.f32.mrb[0].mxu0
        %v1009 = vadd.f32 %v914, %v1008
        %v1010 = vpop.f32.mrb[0].mxu0
        %1011 = vmatprep.mubr.bf16.mxu0 0
        %1012 = vmatmul.mubr.bf16.gmra.mrb[0].mxu0 %v927
        %v1013 = vpop.f32.mrb[0].mxu0
        %v1014 = vadd.f32 %v914, %v1013
        %v1015 = vpop.f32.mrb[0].mxu0
        %v1016 = vpop.f32.mrb[0].mxu0
        %v1017 = vadd.f32 %v914, %v1016
        %v1018 = vpop.f32.mrb[0].mxu0
        %1019 = vmatprep.mubr.bf16.mxu0 0
        %1020 = vmatmul.mubr.bf16.gmra.mrb[0].mxu0 %v930
        %v1021 = vpop.f32.mrb[0].mxu0
        %v1022 = vadd.f32 %v914, %v1021
        %v1023 = vpop.f32.mrb[0].mxu0
        %v1024 = vpop.f32.mrb[0].mxu0
        %v1025 = vadd.f32 %v914, %v1024
        %v1026 = vpop.f32.mrb[0].mxu0
        %1027 = vmatprep.mubr.bf16.mxu0 0
        %1028 = vmatmul.mubr.bf16.gmra.mrb[0].mxu0 %v933
        %v1029 = vpop.f32.mrb[0].mxu0
        %v1030 = vadd.f32 %v914, %v1029
        %v1031 = vpop.f32.mrb[0].mxu0
        %v1032 = vpop.f32.mrb[0].mxu0
        %v1033 = vadd.f32 %v914, %v1032
        %v1034 = vpop.f32.mrb[0].mxu0
        %1035 = vmatprep.mubr.bf16.mxu0 0
        %1036 = vmatmul.mubr.bf16.gmra.mrb[0].mxu0 %v936
        %v1037 = vpop.f32.mrb[0].mxu0
        %v1038 = vadd.f32 %v914, %v1037
        %v1039 = vpop.f32.mrb[0].mxu0
        %v1040 = vpop.f32.mrb[0].mxu0
        %v1041 = vadd.f32 %v914, %v1040
        %v1042 = vpop.f32.mrb[0].mxu0
        %1043 = vmatprep.mubr.bf16.mxu0 0
        %1044 = vmatmul.mubr.bf16.gmra.mrb[0].mxu0 %v939
        %v1045 = vpop.f32.mrb[0].mxu0
        %v1046 = vadd.f32 %v914, %v1045
        %v1047 = vpop.f32.mrb[0].mxu0
        %v1048 = vpop.f32.mrb[0].mxu0
        %v1049 = vadd.f32 %v914, %v1048
        %v1050 = vpop.f32.mrb[0].mxu0
        %1051 = vmatprep.mubr.bf16.mxu0 0
        %1052 = vmatmul.mubr.bf16.gmra.mrb[0].mxu0 %v942
        %v1053 = vpop.f32.mrb[0].mxu0
        %v1054 = vadd.f32 %v914, %v1053
        %v1055 = vpop.f32.mrb[0].mxu0
        %v1056 = vpop.f32.mrb[0].mxu0
        %v1057 = vadd.f32 %v914, %v1056
        %v1058 = vpop.f32.mrb[0].mxu0
        %1059 = vmatprep.mubr.bf16.mxu0 0
        %1060 = vmatmul.mubr.bf16.gmra.mrb[0].mxu0 %v945
        %v1061 = vpop.f32.mrb[0].mxu0
        %v1062 = vadd.f32 %v914, %v1061
        %v1063 = vpop.f32.mrb[0].mxu0
        %v1064 = vpop.f32.mrb[0].mxu0
        %v1065 = vadd.f32 %v914, %v1064
        %v1066 = vpop.f32.mrb[0].mxu0
        %1067 = vmatprep.mubr.bf16.mxu0 0
        %1068 = vmatmul.mubr.bf16.gmra.mrb[0].mxu0 %v948
        %v1069 = vpop.f32.mrb[0].mxu0
        %v1070 = vadd.f32 %v914, %v1069
        %v1071 = vpop.f32.mrb[0].mxu0
        %v1072 = vpop.f32.mrb[0].mxu0
        %v1073 = vadd.f32 %v914, %v1072
        %v1074 = vpop.f32.mrb[0].mxu0
        %1075 = vmatprep.mubr.bf16.mxu0 0
        %1076 = vmatmul.mubr.bf16.gmra.mrb[0].mxu0 %v951
        %v1077 = vpop.f32.mrb[0].mxu0
        %v1078 = vadd.f32 %v914, %v1077
        %v1079 = vpop.f32.mrb[0].mxu0
        %v1080 = vpop.f32.mrb[0].mxu0
        %v1081 = vadd.f32 %v914, %v1080
        %v1082 = vpop.f32.mrb[0].mxu0
        %1083 = vmatprep.mubr.bf16.mxu0 0
        %1084 = vmatmul.mubr.bf16.gmra.mrb[0].mxu0 %v954
        %v1085 = vpop.f32.mrb[0].mxu0
        %v1086 = vadd.f32 %v914, %v1085
        %v1087 = vpop.f32.mrb[0].mxu0
        %v1088 = vpop.f32.mrb[0].mxu0
        %v1089 = vadd.f32 %v914, %v1088
        %v1090 = vpop.f32.mrb[0].mxu0
        %1091 = vmatprep.mubr.bf16.mxu0 0
        %1092 = vmatmul.mubr.bf16.gmra.mrb[0].mxu0 %v957
        %v1093 = vpop.f32.mrb[0].mxu0
        %v1094 = vadd.f32 %v914, %v1093
        %v1095 = vpop.f32.mrb[0].mxu0
        %v1096 = vpop.f32.mrb[0].mxu0
        %v1097 = vadd.f32 %v914, %v1096
        %v1098 = vpop.f32.mrb[0].mxu0
        %1099 = vmatprep.mubr.bf16.mxu0 0
        %1100 = vmatmul.mubr.bf16.gmra.mrb[0].mxu0 %v960
        %v1101 = vpop.f32.mrb[0].mxu0
        %v1102 = vadd.f32 %v914, %v1101
        %v1103 = vpop.f32.mrb[0].mxu0
        %v1104 = vpop.f32.mrb[0].mxu0
        %v1105 = vadd.f32 %v914, %v1104
        %v1106 = vpop.f32.mrb[0].mxu0
        %1107 = vmatprep.mubr.bf16.mxu0 0
        %1108 = vmatmul.mubr.bf16.gmra.mrb[0].mxu0 %v963
        %v1109 = vpop.f32.mrb[0].mxu0
        %v1110 = vadd.f32 %v914, %v1109
        %v1111 = vpop.f32.mrb[0].mxu0
        %v1112 = vpop.f32.mrb[0].mxu0
        %v1113 = vadd.f32 %v914, %v1112
        %v1114 = vpop.f32.mrb[0].mxu0
        %1115 = vmatprep.mubr.bf16.mxu0 0
        %1116 = vmatmul.mubr.bf16.gmra.mrb[0].mxu0 %v966
        %v1117 = vpop.f32.mrb[0].mxu0
        %v1118 = vadd.f32 %v914, %v1117
        %v1119 = vpop.f32.mrb[0].mxu0
        %v1120 = vpop.f32.mrb[0].mxu0
        %v1121 = vadd.f32 %v914, %v1120
        %v1122 = vpop.f32.mrb[0].mxu0
        %1123 = vmatprep.mubr.bf16.mxu0 0
        %1124 = vmatmul.mubr.bf16.gmra.mrb[0].mxu0 %v969
        %v1125 = vpop.f32.mrb[0].mxu0
        %v1126 = vadd.f32 %v914, %v1125
        %v1127 = vpop.f32.mrb[0].mxu0
        %v1128 = vpop.f32.mrb[0].mxu0
        %v1129 = vadd.f32 %v914, %v1128
        %v1130 = vpop.f32.mrb[0].mxu0
        %1131 = vdwg.mxu0
        %1132 = vst [vmem:[%s272] sm:$0xff] %v1006
        %1133 = vst [vmem:[%s272 + $0x8] sm:$0xff] %v1009
        %1134 = vst [vmem:[%s272 + $0x10] sm:$0xff] %v1014
        %1135 = vst [vmem:[%s272 + $0x18] sm:$0xff] %v1017
        %1136 = vst [vmem:[%s272 + $0x20] sm:$0xff] %v1022
        %1137 = vst [vmem:[%s272 + $0x28] sm:$0xff] %v1025
        %1138 = vst [vmem:[%s272 + $0x30] sm:$0xff] %v1030
        %1139 = vst [vmem:[%s272 + $0x38] sm:$0xff] %v1033
        %1140 = vst [vmem:[%s272 + $0x40] sm:$0xff] %v1038
        %1141 = vst [vmem:[%s272 + $0x48] sm:$0xff] %v1041
        %1142 = vst [vmem:[%s272 + $0x50] sm:$0xff] %v1046
        %1143 = vst [vmem:[%s272 + $0x58] sm:$0xff] %v1049
        %1144 = vst [vmem:[%s272 + $0x60] sm:$0xff] %v1054
        %1145 = vst [vmem:[%s272 + $0x68] sm:$0xff] %v1057
        %1146 = vst [vmem:[%s272 + $0x70] sm:$0xff] %v1062
        %1147 = vst [vmem:[%s272 + $0x78] sm:$0xff] %v1065
        %1148 = vst [vmem:[%s272 + $0x80] sm:$0xff] %v1070
        %1149 = vst [vmem:[%s272 + $0x88] sm:$0xff] %v1073
        %1150 = vst [vmem:[%s272 + $0x90] sm:$0xff] %v1078
        %1151 = vst [vmem:[%s272 + $0x98] sm:$0xff] %v1081
        %1152 = vst [vmem:[%s272 + $0xa0] sm:$0xff] %v1086
        %1153 = vst [vmem:[%s272 + $0xa8] sm:$0xff] %v1089
        %1154 = vst [vmem:[%s272 + $0xb0] sm:$0xff] %v1094
        %1155 = vst [vmem:[%s272 + $0xb8] sm:$0xff] %v1097
        %1156 = vst [vmem:[%s272 + $0xc0] sm:$0xff] %v1102
        %1157 = vst [vmem:[%s272 + $0xc8] sm:$0xff] %v1105
        %1158 = vst [vmem:[%s272 + $0xd0] sm:$0xff] %v1110
        %1159 = vst [vmem:[%s272 + $0xd8] sm:$0xff] %v1113
        %1160 = vst [vmem:[%s272 + $0xe0] sm:$0xff] %v1118
        %1161 = vst [vmem:[%s272 + $0xe8] sm:$0xff] %v1121
        %1162 = vst [vmem:[%s272 + $0xf0] sm:$0xff] %v1126
        %1163 = vst [vmem:[%s272 + $0xf8] sm:$0xff] %v1129
        %s1164 = sand.u32 %s181, 1
        %s1165 = scalar_lea.sflag [#allocation3], %s1164
        %s1166 = sand.u32 %s181, 1
        %s1167 = smul.addr %s1166, 256
        %s1168 = scalar_lea.vmem [#allocation2], %s1167
        // Predicated region
        $region49: #{tpu_custom_call.1} parent=47 // pred_check
          %p1169 = pneg %p191
        $region50: #{tpu_custom_call.1} parent=47 // pred_check_branch
          %1171 = sbr.rel (%p1169) target = $region52
        $region51: #{tpu_custom_call.1} parent=47 // pred_region
          %s1172 = smul.u32 32, %s21
          %s1174 = ssub.s32 4096, 4096
          %1175 = vsyncadd %s1165, %s1174
          %s1176 = smul.addr %s1172, 128
          %s1177 = scalar_lea.hbm %s7, %s1176
          %s1178 = sshll.u32 %s1168, 4
          %s1179 = int_to_ptr.vmem [resolvable:$true] %s1178
          %1184 = dma.vmem_to_hbm [thread:$0]  %s1179, 4096, %s1177, %s1165, 128, 128, 8
        $region52: #{tpu_custom_call.1} parent=47 // pred_fallthru
          _
      $region48: #{tpu_custom_call.1} parent=5 // pred_fallthru
        _
      %p1185 = scmp.le.s32.totalorder 2, %s16
      // Predicated region
      $region53: #{tpu_custom_call.1} parent=5 // pred_check
        %p1186 = pneg %p1185
      $region54: #{tpu_custom_call.1} parent=5 // pred_check_branch
        %1188 = sbr.rel (%p1186) target = $region56
      $region55: #{tpu_custom_call.1} parent=5 // pred_region
        %s1189 = ssub.s32 %s16, 2
        // Predicated region
        $region57: #{tpu_custom_call.1} parent=55 // pred_check
          %p1190 = pneg %p197
        $region58: #{tpu_custom_call.1} parent=55 // pred_check_branch
          %1192 = sbr.rel (%p1190) target = $region60
        $region59: #{tpu_custom_call.1} parent=55 // pred_region
          %s1193 = sand.u32 %s182, 1
          %s1194 = scalar_lea.sflag [#allocation3], %s1193
          %s1195 = sand.u32 %s182, 1
          %s1196 = smul.addr %s1195, 256
          %s1197 = scalar_lea.vmem [#allocation2], %s1196
          %1198 = dma.done %s1194, 4096
        $region60: #{tpu_custom_call.1} parent=55 // pred_fallthru
          _
      $region56: #{tpu_custom_call.1} parent=5 // pred_fallthru
        _
    $region6: #{tpu_custom_call.1} parent=1 // loop_footer
      %s20 = sadd.s32 1, %s16
    $region7: #{tpu_custom_call.1} parent=1 // loop_footer_branch
      %15 = sbr.rel target = $region3
    $region8: #{tpu_custom_call.1} parent=1 // loop_exit
      _
    %1199 = vsyncpa [#allocation3], 1
    %s1200 = scalar_lea.sflag [#allocation3], 1
    %1201 = vsyncpa %s1200, 1

</llo_original>
